<compile_context>
chip_gen: v5e
topology: v5e:2x2
jax: 0.10.0
libtpu: 0.0.40
codegen_flags: <defaults>
</compile_context>

<pallas_src>
import functools

import jax
import jax.numpy as jnp
from jax.experimental import pallas as pl
from jax.experimental.pallas import tpu as pltpu

_LANE = 128
_SUBLANE = 8


def _round_up(x, m):
    return ((x + m - 1) // m) * m


def _actor_kernel(state_ref, w1_ref, b1_ref, w2_ref, b2_ref, w3_ref, b3_ref,
                  out_ref, *, max_action):
    """One batch tile per grid step. Weights/biases are VMEM-resident across steps.

    MXU operand dtype follows the stored weight dtype (f32 or bf16); accumulation and all
    elementwise work (bias add, ReLU, tanh, max_action scale) stay in f32.
    """
    x = state_ref[...]

    def dense(a, w_ref, b_ref):
        return (
            jnp.dot(a.astype(w_ref.dtype), w_ref[...],
                    preferred_element_type=jnp.float32)
            + b_ref[...]
        )

    h1 = jnp.maximum(dense(x, w1_ref, b1_ref), 0.0)        # ReLU (VPU)
    h2 = jnp.maximum(dense(h1, w2_ref, b2_ref), 0.0)        # ReLU (VPU)
    a = jnp.tanh(dense(h2, w3_ref, b3_ref)) * max_action    # tanh on EUP, THEN scale

    out_ref[...] = a.astype(out_ref.dtype)


def prep_actor_params(raw_params, max_action, *, mxu_dtype=jnp.bfloat16):
    """Pad the hidden dim to 128 lanes (zero padding). The action dim is left unpadded.

    raw_params: dict with torch-equivalent (transposed) weights:
      w1 [S, H], b1 [1, H], w2 [H, H], b2 [1, H], w3 [H, A], b3 [1, A]
    Weights are stored in `mxu_dtype` (bf16 default: native MXU path on v6e/v7x);
    biases stay f32. max_action is kept as a scalar and applied after tanh in-kernel.
    """
    w1, b1 = raw_params["w1"], raw_params["b1"]
    w2, b2 = raw_params["w2"], raw_params["b2"]
    w3, b3 = raw_params["w3"], raw_params["b3"]

    S, H = w1.shape
    A = w3.shape[1]
    Hp = _round_up(H, _LANE)

    w1p = jnp.pad(w1, ((0, 0), (0, Hp - H)))
    b1p = jnp.pad(b1, ((0, 0), (0, Hp - H)))
    w2p = jnp.pad(w2, ((0, Hp - H), (0, Hp - H)))
    b2p = jnp.pad(b2, ((0, 0), (0, Hp - H)))
    w3p = jnp.pad(w3, ((0, Hp - H), (0, 0)))   # [Hp, A] -- action dim NOT padded

    return {
        "w1": w1p.astype(mxu_dtype), "b1": b1p.astype(jnp.float32),
        "w2": w2p.astype(mxu_dtype), "b2": b2p.astype(jnp.float32),
        "w3": w3p.astype(mxu_dtype), "b3": b3.astype(jnp.float32),
        "max_action": float(max_action),
        "action_size": A,
    }


def actor_forward(state, prepped, *, tile_m=1024, out_dtype=jnp.float32):
    """state: [B, state_size] f32 (or bf16 on bandwidth-starved v5e).

    Returns [B, action_size] `out_dtype` actions.
    """
    w1, b1 = prepped["w1"], prepped["b1"]
    w2, b2 = prepped["w2"], prepped["b2"]
    w3, b3 = prepped["w3"], prepped["b3"]
    max_action = prepped["max_action"]

    B, S = state.shape
    A = w3.shape[1]

    # Pad batch only to a multiple of 8 sublanes (cheap); the grid handles ragged tiles.
    rows = _round_up(B, _SUBLANE)
    if rows != B:
        state = jnp.pad(state, ((0, rows - B), (0, 0)))

    # Big tiles (amortize ~0.35us/step overhead) but keep >= 2 grid steps when possible so
    # the "parallel" batch axis can shard across both v7x TensorCores.
    tm = min(_round_up(tile_m, _SUBLANE), _round_up(pl.cdiv(rows, 2), _SUBLANE))
    tm = max(tm, _SUBLANE)
    grid_m = pl.cdiv(rows, tm)

    resident = lambda shape: pl.BlockSpec(shape, lambda i: (0, 0))  # VMEM-resident operand

    kernel = functools.partial(_actor_kernel, max_action=max_action)

    out = pl.pallas_call(
        kernel,
        out_shape=jax.ShapeDtypeStruct((rows, A), out_dtype),
        grid=(grid_m,),
        in_specs=[
            pl.BlockSpec((tm, S), lambda i: (i, 0)),   # state tile, pipelined over batch
            resident(w1.shape), resident(b1.shape),    # weights/biases stay in VMEM
            resident(w2.shape), resident(b2.shape),
            resident(w3.shape), resident(b3.shape),
        ],
        # Last block dim == full array dim (A), so the (8,128) rule is satisfied.
        out_specs=pl.BlockSpec((tm, A), lambda i: (i, 0)),
        compiler_params=pltpu.CompilerParams(
            dimension_semantics=("parallel",),
            # VMEM use at tm=1024 is well under every generation's default scoped limit;
            # set vmem_limit_bytes only if tile_m is pushed beyond ~8k rows.
        ),
    )(state, w1, b1, w2, b2, w3, b3)

    if rows != B:
        out = out[:B]
    return out


def init_actor_params(key, state_size, action_size, hidden_size=64):
    """PyTorch nn.Linear-style init: U(-1/sqrt(fan_in), 1/sqrt(fan_in)).
    Weights stored as [in, out] (transposed relative to torch's [out, in])."""
    def linear(k, fan_in, fan_out):
        kw, kb = jax.random.split(k)
        bound = 1.0 / jnp.sqrt(fan_in)
        w = jax.random.uniform(kw, (fan_in, fan_out), jnp.float32, -bound, bound)
        b = jax.random.uniform(kb, (1, fan_out), jnp.float32, -bound, bound)
        return w, b

    k1, k2, k3 = jax.random.split(key, 3)
    w1, b1 = linear(k1, state_size, hidden_size)
    w2, b2 = linear(k2, hidden_size, hidden_size)
    w3, b3 = linear(k3, hidden_size, action_size)
    return {"w1": w1, "b1": b1, "w2": w2, "b2": b2, "w3": w3, "b3": b3}


def actor_reference(state, raw_params, max_action):
    x = jnp.maximum(state @ raw_params["w1"] + raw_params["b1"], 0.0)
    x = jnp.maximum(x @ raw_params["w2"] + raw_params["b2"], 0.0)
    return jnp.tanh(x @ raw_params["w3"] + raw_params["b3"]) * max_action


if __name__ == "__main__":
    key = jax.random.PRNGKey(0)
    k_params, k_state = jax.random.split(key)

    batch = 2
    state_size = 16
    action_size = 8
    hidden_size = 64
    max_action = 2.0

    raw_params = init_actor_params(k_params, state_size, action_size, hidden_size)
    state = jax.random.normal(k_state, (batch, state_size), jnp.float32)
    ref = actor_reference(state, raw_params, max_action)

    # f32-weight path: tolerance covers possible precision differences between the Mosaic
    # MXU f32 path and XLA's default f32 matmul emulation (both use bf16-based passes).
    prepped_f32 = prep_actor_params(raw_params, max_action, mxu_dtype=jnp.float32)
    out_f32 = jax.block_until_ready(actor_forward(state, prepped_f32))
    assert out_f32.shape == (batch, action_size)
    assert jnp.allclose(out_f32, ref, atol=1e-2, rtol=1e-2), "f32 path mismatch vs reference"

    # bf16-weight path (default, recommended for v6e/v7x): looser tolerance.
    prepped_bf16 = prep_actor_params(raw_params, max_action)  # mxu_dtype=bf16 default
    out_bf16 = jax.block_until_ready(actor_forward(state, prepped_bf16))
    assert out_bf16.shape == (batch, action_size)
    assert jnp.allclose(out_bf16, ref, atol=5e-2, rtol=5e-2), "bf16 path mismatch vs reference"

    print("KERNEL_OK")
</pallas_src>

<mosaic_0001>
module attributes {stable_mosaic.version = 11 : i64} {
  func.func @_actor_kernel(%arg0: i32, %arg1: memref<8x16xf32, #tpu.memory_space<vmem>>, %arg2: memref<16x128xf32, #tpu.memory_space<vmem>>, %arg3: memref<1x128xf32, #tpu.memory_space<vmem>>, %arg4: memref<128x128xf32, #tpu.memory_space<vmem>>, %arg5: memref<1x128xf32, #tpu.memory_space<vmem>>, %arg6: memref<128x8xf32, #tpu.memory_space<vmem>>, %arg7: memref<1x8xf32, #tpu.memory_space<vmem>>, %arg8: memref<8x8xf32, #tpu.memory_space<vmem>>) attributes {dimension_semantics = [#tpu.dimension_semantics<parallel>], iteration_bounds = array<i64: 1>, scalar_prefetch = 0 : i64, scratch_operands = 0 : i64, tpu.core_type = #tpu.core_type<tc>, window_params = [{transform_indices = @transform_0, window_bounds = array<i64: 8, 16>}, {pipeline_mode = #tpu.pipeline_mode<synchronous>, transform_indices = @transform_1, window_bounds = array<i64: 16, 128>}, {pipeline_mode = #tpu.pipeline_mode<synchronous>, transform_indices = @transform_2, window_bounds = array<i64: 1, 128>}, {pipeline_mode = #tpu.pipeline_mode<synchronous>, transform_indices = @transform_3, window_bounds = array<i64: 128, 128>}, {pipeline_mode = #tpu.pipeline_mode<synchronous>, transform_indices = @transform_4, window_bounds = array<i64: 1, 128>}, {pipeline_mode = #tpu.pipeline_mode<synchronous>, transform_indices = @transform_5, window_bounds = array<i64: 128, 8>}, {pipeline_mode = #tpu.pipeline_mode<synchronous>, transform_indices = @transform_6, window_bounds = array<i64: 1, 8>}, {transform_indices = @transform_7, window_bounds = array<i64: 8, 8>}]} {
    %c0 = arith.constant 0 : index
    %c0_0 = arith.constant 0 : index
    %0 = vector.load %arg1[%c0, %c0_0] : memref<8x16xf32, #tpu.memory_space<vmem>>, vector<8x16xf32>
    %c0_1 = arith.constant 0 : index
    %c0_2 = arith.constant 0 : index
    %1 = vector.load %arg2[%c0_1, %c0_2] : memref<16x128xf32, #tpu.memory_space<vmem>>, vector<16x128xf32>
    %cst = arith.constant dense<0.000000e+00> : vector<8x128xf32>
    %2 = tpu.matmul %0, %1, %cst {dimension_numbers = #tpu.dot_dimension_numbers<[1], [0], [0], [1], [0, 0, 1, 1], [], []>} : vector<8x16xf32>, vector<16x128xf32>, vector<8x128xf32> -> vector<8x128xf32>
    %c0_3 = arith.constant 0 : index
    %c0_4 = arith.constant 0 : index
    %3 = vector.load %arg3[%c0_3, %c0_4] : memref<1x128xf32, #tpu.memory_space<vmem>>, vector<1x128xf32>
    %4 = vector.broadcast %3 : vector<1x128xf32> to vector<8x128xf32>
    %5 = arith.addf %2, %4 : vector<8x128xf32>
    %cst_5 = arith.constant 0.000000e+00 : f32
    %6 = vector.broadcast %cst_5 : f32 to vector<8x128xf32>
    %7 = arith.maximumf %5, %6 : vector<8x128xf32>
    %c0_6 = arith.constant 0 : index
    %c0_7 = arith.constant 0 : index
    %8 = vector.load %arg4[%c0_6, %c0_7] : memref<128x128xf32, #tpu.memory_space<vmem>>, vector<128x128xf32>
    %cst_8 = arith.constant dense<0.000000e+00> : vector<8x128xf32>
    %9 = tpu.matmul %7, %8, %cst_8 {dimension_numbers = #tpu.dot_dimension_numbers<[1], [0], [0], [1], [0, 0, 1, 1], [], []>} : vector<8x128xf32>, vector<128x128xf32>, vector<8x128xf32> -> vector<8x128xf32>
    %c0_9 = arith.constant 0 : index
    %c0_10 = arith.constant 0 : index
    %10 = vector.load %arg5[%c0_9, %c0_10] : memref<1x128xf32, #tpu.memory_space<vmem>>, vector<1x128xf32>
    %11 = vector.broadcast %10 : vector<1x128xf32> to vector<8x128xf32>
    %12 = arith.addf %9, %11 : vector<8x128xf32>
    %cst_11 = arith.constant 0.000000e+00 : f32
    %13 = vector.broadcast %cst_11 : f32 to vector<8x128xf32>
    %14 = arith.maximumf %12, %13 : vector<8x128xf32>
    %c0_12 = arith.constant 0 : index
    %c0_13 = arith.constant 0 : index
    %15 = vector.load %arg6[%c0_12, %c0_13] : memref<128x8xf32, #tpu.memory_space<vmem>>, vector<128x8xf32>
    %cst_14 = arith.constant dense<0.000000e+00> : vector<8x8xf32>
    %16 = tpu.matmul %14, %15, %cst_14 {dimension_numbers = #tpu.dot_dimension_numbers<[1], [0], [0], [1], [0, 0, 1, 1], [], []>} : vector<8x128xf32>, vector<128x8xf32>, vector<8x8xf32> -> vector<8x8xf32>
    %c0_15 = arith.constant 0 : index
    %c0_16 = arith.constant 0 : index
    %17 = vector.load %arg7[%c0_15, %c0_16] : memref<1x8xf32, #tpu.memory_space<vmem>>, vector<1x8xf32>
    %18 = vector.broadcast %17 : vector<1x8xf32> to vector<8x8xf32>
    %19 = arith.addf %16, %18 : vector<8x8xf32>
    %20 = math.tanh %19 : vector<8x8xf32>
    %cst_17 = arith.constant 2.000000e+00 : f32
    %21 = vector.broadcast %cst_17 : f32 to vector<8x8xf32>
    %22 = arith.mulf %20, %21 : vector<8x8xf32>
    %c0_18 = arith.constant 0 : index
    %c0_19 = arith.constant 0 : index
    %23 = vector.load %arg8[%c0_18, %c0_19] : memref<8x8xf32, #tpu.memory_space<vmem>>, vector<8x8xf32>
    tpu.vector_store %arg8[%c0_18, %c0_19], %22 {strides = array<i32>} : memref<8x8xf32, #tpu.memory_space<vmem>>, vector<8x8xf32>,
    return
  }
  func.func @transform_0(%arg0: i32) -> (i32, i32) {
    %c0_i32 = arith.constant 0 : i32
    %c0_i32_0 = arith.constant 0 : i32
    return %arg0, %c0_i32 : i32, i32
  }
  func.func @transform_1(%arg0: i32) -> (i32, i32) {
    %c0_i32 = arith.constant 0 : i32
    %c0_i32_0 = arith.constant 0 : i32
    %c0_i32_1 = arith.constant 0 : i32
    return %c0_i32, %c0_i32_0 : i32, i32
  }
  func.func @transform_2(%arg0: i32) -> (i32, i32) {
    %c0_i32 = arith.constant 0 : i32
    %c0_i32_0 = arith.constant 0 : i32
    %c0_i32_1 = arith.constant 0 : i32
    return %c0_i32, %c0_i32_0 : i32, i32
  }
  func.func @transform_3(%arg0: i32) -> (i32, i32) {
    %c0_i32 = arith.constant 0 : i32
    %c0_i32_0 = arith.constant 0 : i32
    %c0_i32_1 = arith.constant 0 : i32
    return %c0_i32, %c0_i32_0 : i32, i32
  }
  func.func @transform_4(%arg0: i32) -> (i32, i32) {
    %c0_i32 = arith.constant 0 : i32
    %c0_i32_0 = arith.constant 0 : i32
    %c0_i32_1 = arith.constant 0 : i32
    return %c0_i32, %c0_i32_0 : i32, i32
  }
  func.func @transform_5(%arg0: i32) -> (i32, i32) {
    %c0_i32 = arith.constant 0 : i32
    %c0_i32_0 = arith.constant 0 : i32
    %c0_i32_1 = arith.constant 0 : i32
    return %c0_i32, %c0_i32_0 : i32, i32
  }
  func.func @transform_6(%arg0: i32) -> (i32, i32) {
    %c0_i32 = arith.constant 0 : i32
    %c0_i32_0 = arith.constant 0 : i32
    %c0_i32_1 = arith.constant 0 : i32
    return %c0_i32, %c0_i32_0 : i32, i32
  }
  func.func @transform_7(%arg0: i32) -> (i32, i32) {
    %c0_i32 = arith.constant 0 : i32
    %c0_i32_0 = arith.constant 0 : i32
    return %arg0, %c0_i32 : i32, i32
  }
}

</mosaic_0001>

<llo_original>
// kernel: tpu_custom_call.1
$region0: #{tpu_custom_call.1}
  #allocation0 [shape = 'u32[]', space=smem, size = 0x4, offset = 0x4, fixed_abs, tag = 'smem constant byte address 0x4 - core index']
  #allocation1 [shape = 'u32[72,128]{1,0:T(1,128)}', space=vmem, size = 0x9000, scoped, tag = 'internal scratch']
  %s0 = inlined_call_operand.vmem [shape: f32[8,16], index: 0, kind: input, shape index: {}]
  %s1 = inlined_call_operand.hbm [shape: f32[16,128], index: 1, kind: input, shape index: {}]
  %s2 = inlined_call_operand.vmem [shape: f32[1,128], index: 2, kind: input, shape index: {}]
  %s3 = inlined_call_operand.vmem [shape: f32[128,128], index: 3, kind: input, shape index: {}]
  %s4 = inlined_call_operand.vmem [shape: f32[1,128], index: 4, kind: input, shape index: {}]
  %s5 = inlined_call_operand.vmem [shape: f32[128,8], index: 5, kind: input, shape index: {}]
  %s6 = inlined_call_operand.vmem [shape: f32[1,8], index: 6, kind: input, shape index: {}]
  %s7 = inlined_call_operand.hbm [shape: f32[8,8], index: 7, kind: output, shape index: {}]
  %s8 = sld [smem:[#allocation0]]
  $region42: #{tpu_custom_call.1} parent=0
    _
  %s10 = ssub.s32 1, %s8
  %s11 = scalar_select 0, %s10, %s8
  $region1: #{tpu_custom_call.1} parent=0
    #allocation2 [shape = 'u8[8192]{0}', space=vmem, size = 0x2000, scoped, tag = 'input window, operand 1, single buffered']
    #allocation3 [shape = 's32[1]{0}', space=sflag, size = 0x4, scoped, tag = 'scoped memory for tpu_custom_call.1']
    #allocation4 [shape = 's32[1]{0}', space=sflag, size = 0x4, scoped, tag = 'scoped memory for tpu_custom_call.1']
    #allocation5 [shape = 'u8[4096]{0}', space=vmem, size = 0x1000, scoped, tag = 'output window, operand 0, single buffered']
    %12 = vsyncpa [#allocation3], 0
    %13 = vsyncpa [#allocation4], 0
    // Predicated region
    $region2: #{tpu_custom_call.1} parent=1 // pred_check
      _
    $region3: #{tpu_custom_call.1} parent=1 // pred_check_branch
      %15 = sbr.rel (0) target = $region5
    $region4: #{tpu_custom_call.1} parent=1 // pred_region
      _
    $region5: #{tpu_custom_call.1} parent=1 // pred_fallthru
      _
    // Predicated region
    $region6: #{tpu_custom_call.1} parent=1 // pred_check
      _
    $region7: #{tpu_custom_call.1} parent=1 // pred_check_branch
      %17 = sbr.rel (0) target = $region9
    $region8: #{tpu_custom_call.1} parent=1 // pred_region
      %19 = vsyncadd [#allocation3], 0
      %s20 = sshll.u32 %s1, 4
      %s21 = int_to_ptr.hbm [resolvable:$true] %s20
      %s22 = sshll.u32 [#allocation2], 4
      %s23 = int_to_ptr.vmem [resolvable:$true] %s22
      %28 = dma.hbm_to_vmem [thread:$0]  %s21, 256, %s23, [#allocation3], 128, 128, 8
    $region9: #{tpu_custom_call.1} parent=1 // pred_fallthru
      _
    // Predicated region
    $region10: #{tpu_custom_call.1} parent=1 // pred_check
      _
    $region11: #{tpu_custom_call.1} parent=1 // pred_check_branch
      %30 = sbr.rel (0) target = $region13
    $region12: #{tpu_custom_call.1} parent=1 // pred_region
      _
    $region13: #{tpu_custom_call.1} parent=1 // pred_fallthru
      _
    // Predicated region
    $region14: #{tpu_custom_call.1} parent=1 // pred_check
      _
    $region15: #{tpu_custom_call.1} parent=1 // pred_check_branch
      %32 = sbr.rel (0) target = $region17
    $region16: #{tpu_custom_call.1} parent=1 // pred_region
      _
    $region17: #{tpu_custom_call.1} parent=1 // pred_fallthru
      _
    // Predicated region
    $region18: #{tpu_custom_call.1} parent=1 // pred_check
      _
    $region19: #{tpu_custom_call.1} parent=1 // pred_check_branch
      %34 = sbr.rel (0) target = $region21
    $region20: #{tpu_custom_call.1} parent=1 // pred_region
      _
    $region21: #{tpu_custom_call.1} parent=1 // pred_fallthru
      _
    // Predicated region
    $region22: #{tpu_custom_call.1} parent=1 // pred_check
      _
    $region23: #{tpu_custom_call.1} parent=1 // pred_check_branch
      %36 = sbr.rel (0) target = $region25
    $region24: #{tpu_custom_call.1} parent=1 // pred_region
      _
    $region25: #{tpu_custom_call.1} parent=1 // pred_fallthru
      _
    // Predicated region
    $region26: #{tpu_custom_call.1} parent=1 // pred_check
      _
    $region27: #{tpu_custom_call.1} parent=1 // pred_check_branch
      %38 = sbr.rel (0) target = $region29
    $region28: #{tpu_custom_call.1} parent=1 // pred_region
      _
    $region29: #{tpu_custom_call.1} parent=1 // pred_fallthru
      _
    // Predicated region
    $region30: #{tpu_custom_call.1} parent=1 // pred_check
      _
    $region31: #{tpu_custom_call.1} parent=1 // pred_check_branch
      %40 = sbr.rel (0) target = $region33
    $region32: #{tpu_custom_call.1} parent=1 // pred_region
      %42 = dma.done [#allocation3], 256
    $region33: #{tpu_custom_call.1} parent=1 // pred_fallthru
      _
    %v43 = vld [vmem:[%s0] sm:$0xff]
    %v44 = vld [vmem:[#allocation2] sm:$0xff]
    %v45 = vld [vmem:[#allocation2 + $0x8] sm:$0xff]
    %v46 = vld [vmem:[%s2] sm:$0x1]
    %v48 = vperm.slane %v46, 0
    %vm50 = vcmask 130048
    %v52 = vsel %vm50, %v43, 0
    %54 = vmatpush.msra.mxu0 0.0
    %55 = vmatpush.msra.mxu0 0.0
    %56 = vmatpush.msra.mxu0 0.0
    %57 = vmatpush.msra.mxu0 0.0
    %58 = vmatpush.msra.mxu0 0.0
    %59 = vmatpush.msra.mxu0 0.0
    %60 = vmatpush.msra.mxu0 0.0
    %61 = vmatpush.msra.mxu0 0.0
    %62 = vmatpush.msra.mxu0 0.0
    %63 = vmatpush.msra.mxu0 0.0
    %64 = vmatpush.msra.mxu0 0.0
    %65 = vmatpush.msra.mxu0 0.0
    %66 = vmatpush.msra.mxu0 0.0
    %67 = vmatpush.msra.mxu0 0.0
    %68 = vmatpush.msra.mxu0 %v45
    %69 = vmatpush.msra.mxu0 %v44
    %70 = vmatmul.f32.gmra.mxu0 %v52
    %v71 = vpop.f32.mrf.mxu0
    %v72 = vadd.f32 %v48, %v71
    %73 = vdwg.mxu0
    %v74 = vmax.f32 %v72, 0.0
    %v75 = vld [vmem:[%s3] sm:$0xff]
    %v76 = vld [vmem:[%s3 + $0x8] sm:$0xff]
    %v77 = vld [vmem:[%s3 + $0x10] sm:$0xff]
    %v78 = vld [vmem:[%s3 + $0x18] sm:$0xff]
    %v79 = vld [vmem:[%s3 + $0x20] sm:$0xff]
    %v80 = vld [vmem:[%s3 + $0x28] sm:$0xff]
    %v81 = vld [vmem:[%s3 + $0x30] sm:$0xff]
    %v82 = vld [vmem:[%s3 + $0x38] sm:$0xff]
    %v83 = vld [vmem:[%s3 + $0x40] sm:$0xff]
    %v84 = vld [vmem:[%s3 + $0x48] sm:$0xff]
    %v85 = vld [vmem:[%s3 + $0x50] sm:$0xff]
    %v86 = vld [vmem:[%s3 + $0x58] sm:$0xff]
    %v87 = vld [vmem:[%s3 + $0x60] sm:$0xff]
    %v88 = vld [vmem:[%s3 + $0x68] sm:$0xff]
    %v89 = vld [vmem:[%s3 + $0x70] sm:$0xff]
    %v90 = vld [vmem:[%s3 + $0x78] sm:$0xff]
    %v91 = vld [vmem:[%s4] sm:$0x1]
    %v93 = vperm.slane %v91, 0
    %95 = vmatpush.msra.mxu0 %v90
    %96 = vmatpush.msra.mxu0 %v89
    %97 = vmatpush.msra.mxu0 %v88
    %98 = vmatpush.msra.mxu0 %v87
    %99 = vmatpush.msra.mxu0 %v86
    %100 = vmatpush.msra.mxu0 %v85
    %101 = vmatpush.msra.mxu0 %v84
    %102 = vmatpush.msra.mxu0 %v83
    %103 = vmatpush.msra.mxu0 %v82
    %104 = vmatpush.msra.mxu0 %v81
    %105 = vmatpush.msra.mxu0 %v80
    %106 = vmatpush.msra.mxu0 %v79
    %107 = vmatpush.msra.mxu0 %v78
    %108 = vmatpush.msra.mxu0 %v77
    %109 = vmatpush.msra.mxu0 %v76
    %110 = vmatpush.msra.mxu0 %v75
    %111 = vmatmul.f32.gmra.mxu0 %v74
    %v112 = vpop.f32.mrf.mxu0
    %v113 = vadd.f32 %v93, %v112
    %114 = vdwg.mxu0
    %v115 = vmax.f32 %v113, 0.0
    %v116 = vld [vmem:[%s5] sm:$0xff]
    %v117 = vld [vmem:[%s5 + $0x8] sm:$0xff]
    %v118 = vld [vmem:[%s5 + $0x10] sm:$0xff]
    %v119 = vld [vmem:[%s5 + $0x18] sm:$0xff]
    %v120 = vld [vmem:[%s5 + $0x20] sm:$0xff]
    %v121 = vld [vmem:[%s5 + $0x28] sm:$0xff]
    %v122 = vld [vmem:[%s5 + $0x30] sm:$0xff]
    %v123 = vld [vmem:[%s5 + $0x38] sm:$0xff]
    %v124 = vld [vmem:[%s5 + $0x40] sm:$0xff]
    %v125 = vld [vmem:[%s5 + $0x48] sm:$0xff]
    %v126 = vld [vmem:[%s5 + $0x50] sm:$0xff]
    %v127 = vld [vmem:[%s5 + $0x58] sm:$0xff]
    %v128 = vld [vmem:[%s5 + $0x60] sm:$0xff]
    %v129 = vld [vmem:[%s5 + $0x68] sm:$0xff]
    %v130 = vld [vmem:[%s5 + $0x70] sm:$0xff]
    %v131 = vld [vmem:[%s5 + $0x78] sm:$0xff]
    %v132 = vld [vmem:[%s6] sm:$0x1]
    %v134 = vperm.slane %v132, 0
    %136 = vmatpush.msra.mxu0 %v131
    %137 = vmatpush.msra.mxu0 %v130
    %138 = vmatpush.msra.mxu0 %v129
    %139 = vmatpush.msra.mxu0 %v128
    %140 = vmatpush.msra.mxu0 %v127
    %141 = vmatpush.msra.mxu0 %v126
    %142 = vmatpush.msra.mxu0 %v125
    %143 = vmatpush.msra.mxu0 %v124
    %144 = vmatpush.msra.mxu0 %v123
    %145 = vmatpush.msra.mxu0 %v122
    %146 = vmatpush.msra.mxu0 %v121
    %147 = vmatpush.msra.mxu0 %v120
    %148 = vmatpush.msra.mxu0 %v119
    %149 = vmatpush.msra.mxu0 %v118
    %150 = vmatpush.msra.mxu0 %v117
    %151 = vmatpush.msra.mxu0 %v116
    %152 = vmatmul.f32.gmra.mxu0 %v115
    %v153 = vpop.f32.mrf.mxu0
    %v154 = vadd.f32 %v134, %v153
    %155 = vdwg.mxu0
    %v156 = vtanh.pop %v154
    %v157 = vmul.f32 %v156, 2.0
    %vm158 = vcmask 64512
    %159 = vst.msk [vmem:[#allocation5] sm:$0xff] %vm158, %v157
    // Predicated region
    $region34: #{tpu_custom_call.1} parent=1 // pred_check
      _
    $region35: #{tpu_custom_call.1} parent=1 // pred_check_branch
      %161 = sbr.rel (0) target = $region37
    $region36: #{tpu_custom_call.1} parent=1 // pred_region
      %163 = vsyncadd [#allocation4], 0
      %s165 = sshll.u32 [#allocation5], 4
      %s166 = int_to_ptr.vmem [resolvable:$true] %s165
      %s167 = sshll.u32 %s7, 4
      %s168 = int_to_ptr.hbm [resolvable:$true] %s167
      %170 = dma.vmem_to_hbm [thread:$0]  %s166, 128, %s168, [#allocation4]
    $region37: #{tpu_custom_call.1} parent=1 // pred_fallthru
      _
    // Predicated region
    $region38: #{tpu_custom_call.1} parent=1 // pred_check
      _
    $region39: #{tpu_custom_call.1} parent=1 // pred_check_branch
      %172 = sbr.rel (0) target = $region41
    $region40: #{tpu_custom_call.1} parent=1 // pred_region
      %174 = dma.done [#allocation4], 128
    $region41: #{tpu_custom_call.1} parent=1 // pred_fallthru
      _
    %175 = vsyncpa [#allocation3], 1
    %176 = vsyncpa [#allocation4], 1

</llo_original>
